<compile_context>
chip_gen: v5e
topology: v5e:2x2
jax: 0.10.0
libtpu: 0.0.40
codegen_flags: <defaults>
</compile_context>

<pallas_src>
import functools

import jax
import jax.numpy as jnp
from jax.experimental import pallas as pl
from jax.experimental.pallas import tpu as pltpu

LANE = 128


def _round_up(n, m):
    return ((n + m - 1) // m) * m


def _pad_to(arr, shape):
    pads = [(0, t - s) for s, t in zip(arr.shape, shape)]
    return jnp.pad(arr, pads)


def prepare_gcn_params(w1, b1, w2, b2):
    """One-time parameter prep (outside the per-call path).

    Pads hidden/class dims to 128 lanes and casts weights to bf16.  The
    contraction (input-feature) dim of W1 is left unpadded so x can be fed to
    the kernel as-is.
    """
    in_size, hidden = w1.shape
    n_class = w2.shape[1]
    h_p = _round_up(hidden, LANE)
    c_p = _round_up(n_class, LANE)

    w1_p = _pad_to(w1, (in_size, h_p)).astype(jnp.bfloat16)
    b1_p = _pad_to(b1.astype(jnp.float32).reshape(1, -1), (1, h_p))
    w2_p = _pad_to(w2, (h_p, c_p)).astype(jnp.bfloat16)
    b2_p = _pad_to(b2.astype(jnp.float32).reshape(1, -1), (1, c_p))
    return w1_p, b1_p, w2_p, b2_p, n_class


def gcn_forward_kernel(n_class, a_ref, x_ref, w1_ref, b1_ref, w2_ref, b2_ref, out_ref):
    """Fused GCN forward: two GraphConv layers + ReLU + log_softmax.

    A and x arrive f32 and are cast to bf16 in-kernel (VPU cast, no extra HBM
    round-trip); all matmul accumulation is f32 on the MXU.
    """
    a = a_ref[...].astype(jnp.bfloat16)     # [N, N]       normalized adjacency
    x = x_ref[...].astype(jnp.bfloat16)     # [N, in_size] unpadded contraction dim

    # ---- layer 1: GraphConv(in -> hidden) + ReLU (A @ (x @ W1) order) ----
    xw = jnp.dot(x, w1_ref[...], preferred_element_type=jnp.float32)         # [N, H_P] f32
    h = jnp.dot(a, xw.astype(jnp.bfloat16),
                preferred_element_type=jnp.float32) + b1_ref[...]             # f32
    h = jnp.maximum(h, 0.0)

    # TODO(synk): dropout reproduced in inference mode (identity); a training-mode
    # kernel would draw a keep-mask with pltpu.prng_seed / pltpu.prng_random_bits.

    # ---- layer 2: GraphConv(hidden -> n_class) ----
    hw = jnp.dot(h.astype(jnp.bfloat16), w2_ref[...],
                 preferred_element_type=jnp.float32)                          # [N, C_P] f32
    logits = jnp.dot(a, hw.astype(jnp.bfloat16),
                     preferred_element_type=jnp.float32) + b2_ref[...]        # f32

    # ---- mask padded class columns, then log_softmax over axis=1 ----
    # (finite -1e30, not -inf: padded columns stay finite and are ignored.)
    col = jax.lax.broadcasted_iota(jnp.int32, logits.shape, 1)
    logits = jnp.where(col < n_class, logits, jnp.float32(-1e30))

    m = jnp.max(logits, axis=1, keepdims=True)
    s = logits - m
    lse = jnp.log(jnp.sum(jnp.exp(s), axis=1, keepdims=True))
    out_ref[...] = s - lse                  # [N, C_P] f32, lane-dense store


@functools.partial(jax.jit, static_argnames=("n_class",))
def gcn_forward_padded(a_norm, x, w1_p, b1_p, w2_p, b2_p, *, n_class):
    """Returns padded log-probs [N, C_P]; consumer slices [:, :n_class] if needed."""
    n, in_size = x.shape
    h_p = w1_p.shape[1]
    c_p = w2_p.shape[1]

    flops = 2 * (n * in_size * h_p + n * n * h_p + n * h_p * c_p + n * n * c_p)
    bytes_accessed = (
        a_norm.size * 4 + x.size * 4 + w1_p.size * 2 + w2_p.size * 2
        + b1_p.size * 4 + b2_p.size * 4 + n * c_p * 4
    )
    cost = pl.CostEstimate(
        flops=flops, transcendentals=n * c_p, bytes_accessed=bytes_accessed)

    vmem_spec = functools.partial(pl.BlockSpec, memory_space=pltpu.MemorySpace.VMEM)
    # Small graph: everything fits comfortably in VMEM, so a single grid-less
    # invocation with full-array blocks (no per-step grid overhead).
    return pl.pallas_call(
        functools.partial(gcn_forward_kernel, n_class),
        out_shape=jax.ShapeDtypeStruct((n, c_p), jnp.float32),
        in_specs=[vmem_spec()] * 6,
        out_specs=vmem_spec(),
        compiler_params=pltpu.CompilerParams(allow_input_fusion=[True] * 6),
        cost_estimate=cost,
    )(a_norm, x, w1_p, b1_p, w2_p, b2_p)


def gcn_forward(a_norm, x, w1, b1, w2, b2):
    """Convenience wrapper matching the original module signature (unpadded out)."""
    w1_p, b1_p, w2_p, b2_p, n_class = prepare_gcn_params(w1, b1, w2, b2)
    out_p = gcn_forward_padded(a_norm, x, w1_p, b1_p, w2_p, b2_p, n_class=n_class)
    return out_p[:, :n_class]


if __name__ == "__main__":
    # Small shapes consistent with GCN(in_size, hidden_size, n_class)
    N, IN_SIZE, HIDDEN, N_CLASS = 64, 16, 32, 8

    key = jax.random.PRNGKey(0)
    k_adj, k_x, k_w1, k_w2 = jax.random.split(key, 4)

    # Deterministic random graph: symmetric adjacency with self-loops,
    # then DGL 'both' normalization D^-1/2 A D^-1/2 (glue, plain JAX).
    adj = (jax.random.uniform(k_adj, (N, N)) < 0.1).astype(jnp.float32)
    adj = jnp.maximum(adj, adj.T)
    adj = jnp.maximum(adj, jnp.eye(N, dtype=jnp.float32))
    deg = jnp.sum(adj, axis=1)
    d_inv_sqrt = 1.0 / jnp.sqrt(deg)
    a_norm = adj * d_inv_sqrt[:, None] * d_inv_sqrt[None, :]

    # Node features and deterministic (Glorot-ish) parameters.
    x = jax.random.normal(k_x, (N, IN_SIZE), dtype=jnp.float32)
    w1 = jax.random.normal(k_w1, (IN_SIZE, HIDDEN), dtype=jnp.float32) / jnp.sqrt(IN_SIZE)
    b1 = jnp.zeros((1, HIDDEN), dtype=jnp.float32)   # GraphConv bias init = zeros
    w2 = jax.random.normal(k_w2, (HIDDEN, N_CLASS), dtype=jnp.float32) / jnp.sqrt(HIDDEN)
    b2 = jnp.zeros((1, N_CLASS), dtype=jnp.float32)

    # One-time parameter prep (padding + bf16 cast hoisted out of the call path).
    w1_p, b1_p, w2_p, b2_p, n_class = prepare_gcn_params(w1, b1, w2, b2)
    w1_p, b1_p, w2_p, b2_p = jax.block_until_ready((w1_p, b1_p, w2_p, b2_p))

    # Per-call path: a single pallas_call; output stays padded, slice at consumer.
    z_padded = gcn_forward_padded(a_norm, x, w1_p, b1_p, w2_p, b2_p, n_class=n_class)
    z_padded = jax.block_until_ready(z_padded)
    z = z_padded[:, :N_CLASS]

    # Pure-JAX f32 reference; kernel uses bf16 matmul inputs, so compare with a
    # bf16-appropriate tolerance.
    h_ref = jnp.maximum(a_norm @ (x @ w1) + b1, 0.0)
    logits_ref = a_norm @ (h_ref @ w2) + b2
    z_ref = jax.nn.log_softmax(logits_ref, axis=1)
    assert z.shape == (N, N_CLASS)
    assert jnp.all(jnp.isfinite(z_padded)), "non-finite values in Pallas output"
    assert jnp.allclose(z, z_ref, atol=1e-1, rtol=1e-1), "Pallas kernel mismatch vs reference"

    print("KERNEL_OK")
</pallas_src>

<mosaic_0001>
module attributes {stable_mosaic.version = 11 : i64} {
  func.func @gcn_forward_kernel(%arg0: memref<64x64xf32, #tpu.memory_space<vmem>>, %arg1: memref<64x16xf32, #tpu.memory_space<vmem>>, %arg2: memref<16x128xbf16, #tpu.memory_space<vmem>>, %arg3: memref<1x128xf32, #tpu.memory_space<vmem>>, %arg4: memref<128x128xbf16, #tpu.memory_space<vmem>>, %arg5: memref<1x128xf32, #tpu.memory_space<vmem>>, %arg6: memref<64x128xf32, #tpu.memory_space<vmem>>) attributes {dimension_semantics = [], scalar_prefetch = 0 : i64, scratch_operands = 0 : i64, tpu.core_type = #tpu.core_type<tc>} {
    %c0 = arith.constant 0 : index
    %c0_0 = arith.constant 0 : index
    %0 = vector.load %arg0[%c0, %c0_0] : memref<64x64xf32, #tpu.memory_space<vmem>>, vector<64x64xf32>
    %1 = arith.truncf %0 : vector<64x64xf32> to vector<64x64xbf16>
    %c0_1 = arith.constant 0 : index
    %c0_2 = arith.constant 0 : index
    %2 = vector.load %arg1[%c0_1, %c0_2] : memref<64x16xf32, #tpu.memory_space<vmem>>, vector<64x16xf32>
    %3 = arith.truncf %2 : vector<64x16xf32> to vector<64x16xbf16>
    %c0_3 = arith.constant 0 : index
    %c0_4 = arith.constant 0 : index
    %4 = vector.load %arg2[%c0_3, %c0_4] : memref<16x128xbf16, #tpu.memory_space<vmem>>, vector<16x128xbf16>
    %cst = arith.constant dense<0.000000e+00> : vector<64x128xf32>
    %5 = tpu.matmul %3, %4, %cst {dimension_numbers = #tpu.dot_dimension_numbers<[1], [0], [0], [1], [0, 0, 1, 1], [], []>} : vector<64x16xbf16>, vector<16x128xbf16>, vector<64x128xf32> -> vector<64x128xf32>
    %6 = arith.truncf %5 : vector<64x128xf32> to vector<64x128xbf16>
    %cst_5 = arith.constant dense<0.000000e+00> : vector<64x128xf32>
    %7 = tpu.matmul %1, %6, %cst_5 {dimension_numbers = #tpu.dot_dimension_numbers<[1], [0], [0], [1], [0, 0, 1, 1], [], []>} : vector<64x64xbf16>, vector<64x128xbf16>, vector<64x128xf32> -> vector<64x128xf32>
    %c0_6 = arith.constant 0 : index
    %c0_7 = arith.constant 0 : index
    %8 = vector.load %arg3[%c0_6, %c0_7] : memref<1x128xf32, #tpu.memory_space<vmem>>, vector<1x128xf32>
    %9 = vector.broadcast %8 : vector<1x128xf32> to vector<64x128xf32>
    %10 = arith.addf %7, %9 : vector<64x128xf32>
    %cst_8 = arith.constant 0.000000e+00 : f32
    %11 = vector.broadcast %cst_8 : f32 to vector<64x128xf32>
    %12 = arith.maximumf %10, %11 : vector<64x128xf32>
    %13 = arith.truncf %12 : vector<64x128xf32> to vector<64x128xbf16>
    %c0_9 = arith.constant 0 : index
    %c0_10 = arith.constant 0 : index
    %14 = vector.load %arg4[%c0_9, %c0_10] : memref<128x128xbf16, #tpu.memory_space<vmem>>, vector<128x128xbf16>
    %cst_11 = arith.constant dense<0.000000e+00> : vector<64x128xf32>
    %15 = tpu.matmul %13, %14, %cst_11 {dimension_numbers = #tpu.dot_dimension_numbers<[1], [0], [0], [1], [0, 0, 1, 1], [], []>} : vector<64x128xbf16>, vector<128x128xbf16>, vector<64x128xf32> -> vector<64x128xf32>
    %16 = arith.truncf %15 : vector<64x128xf32> to vector<64x128xbf16>
    %cst_12 = arith.constant dense<0.000000e+00> : vector<64x128xf32>
    %17 = tpu.matmul %1, %16, %cst_12 {dimension_numbers = #tpu.dot_dimension_numbers<[1], [0], [0], [1], [0, 0, 1, 1], [], []>} : vector<64x64xbf16>, vector<64x128xbf16>, vector<64x128xf32> -> vector<64x128xf32>
    %c0_13 = arith.constant 0 : index
    %c0_14 = arith.constant 0 : index
    %18 = vector.load %arg5[%c0_13, %c0_14] : memref<1x128xf32, #tpu.memory_space<vmem>>, vector<1x128xf32>
    %19 = vector.broadcast %18 : vector<1x128xf32> to vector<64x128xf32>
    %20 = arith.addf %17, %19 : vector<64x128xf32>
    %21 = tpu.iota {dimensions = array<i32: 1>} : vector<64x128xi32>
    %c8_i32 = arith.constant 8 : i32
    %22 = vector.broadcast %c8_i32 : i32 to vector<64x128xi32>
    %23 = arith.cmpi slt, %21, %22 : vector<64x128xi32>
    %cst_15 = arith.constant -1.000000e+30 : f32
    %24 = vector.broadcast %cst_15 : f32 to vector<64x128xf32>
    %25 = arith.select %23, %20, %24 : vector<64x128xi1>, vector<64x128xf32>
    %cst_16 = arith.constant dense<0xFF800000> : vector<64xf32>
    %26 = vector.multi_reduction <maximumf>, %25, %cst_16 [1] : vector<64x128xf32> to vector<64xf32>
    %27 = vector.shape_cast %26 : vector<64xf32> to vector<64x1xf32>
    %28 = vector.broadcast %27 : vector<64x1xf32> to vector<64x128xf32>
    %29 = arith.subf %25, %28 : vector<64x128xf32>
    %30 = math.exp %29 : vector<64x128xf32>
    %cst_17 = arith.constant dense<0.000000e+00> : vector<64xf32>
    %31 = vector.multi_reduction <add>, %30, %cst_17 [1] : vector<64x128xf32> to vector<64xf32>
    %32 = vector.shape_cast %31 : vector<64xf32> to vector<64x1xf32>
    %33 = math.log %32 : vector<64x1xf32>
    %34 = vector.broadcast %33 : vector<64x1xf32> to vector<64x128xf32>
    %35 = arith.subf %29, %34 : vector<64x128xf32>
    %c0_18 = arith.constant 0 : index
    %c0_19 = arith.constant 0 : index
    %36 = vector.load %arg6[%c0_18, %c0_19] : memref<64x128xf32, #tpu.memory_space<vmem>>, vector<64x128xf32>
    tpu.vector_store %arg6[%c0_18, %c0_19], %35 {strides = array<i32>} : memref<64x128xf32, #tpu.memory_space<vmem>>, vector<64x128xf32>,
    return
  }
}

</mosaic_0001>

<llo_original>
// kernel: gcn_forward_padded.1
$region0: #{gcn_forward_padded.1}
  #allocation0 [shape = 'u32[]', space=smem, size = 0x4, offset = 0x4, fixed_abs, tag = 'smem constant byte address 0x4 - core index']
  #allocation1 [shape = 'u32[72,128]{1,0:T(1,128)}', space=vmem, size = 0x9000, scoped, tag = 'internal scratch']
  %s0 = inlined_call_operand.vmem [shape: f32[64,64], index: 0, kind: input, shape index: {}]
  %s1 = inlined_call_operand.vmem [shape: f32[64,16], index: 1, kind: input, shape index: {}]
  %s2 = inlined_call_operand.vmem [shape: bf16[16,128], index: 2, kind: input, shape index: {}]
  %s3 = inlined_call_operand.vmem [shape: f32[1,128], index: 3, kind: input, shape index: {}]
  %s4 = inlined_call_operand.hbm [shape: bf16[128,128], index: 4, kind: input, shape index: {}]
  %s5 = inlined_call_operand.vmem [shape: f32[1,128], index: 5, kind: input, shape index: {}]
  %s6 = inlined_call_operand.hbm [shape: f32[64,128], index: 6, kind: output, shape index: {}]
  %s7 = sld [smem:[#allocation0]]
  $region38: #{gcn_forward_padded.1} parent=0
    _
  %s9 = ssub.s32 1, %s7
  %s10 = scalar_select 0, %s9, %s7
  $region1: #{gcn_forward_padded.1} parent=0
    #allocation2 [shape = 'u8[32768]{0}', space=vmem, size = 0x8000, scoped, tag = 'input window, operand 4, single buffered']
    #allocation3 [shape = 's32[1]{0}', space=sflag, size = 0x4, scoped, tag = 'scoped memory for gcn_forward_padded.1']
    #allocation4 [shape = 's32[1]{0}', space=sflag, size = 0x4, scoped, tag = 'scoped memory for gcn_forward_padded.1']
    #allocation5 [shape = 'u8[32768]{0}', space=vmem, size = 0x8000, scoped, tag = 'output window, operand 0, single buffered']
    %11 = vsyncpa [#allocation3], 0
    %12 = vsyncpa [#allocation4], 0
    // Predicated region
    $region2: #{gcn_forward_padded.1} parent=1 // pred_check
      _
    $region3: #{gcn_forward_padded.1} parent=1 // pred_check_branch
      %14 = sbr.rel (0) target = $region5
    $region4: #{gcn_forward_padded.1} parent=1 // pred_region
      _
    $region5: #{gcn_forward_padded.1} parent=1 // pred_fallthru
      _
    // Predicated region
    $region6: #{gcn_forward_padded.1} parent=1 // pred_check
      _
    $region7: #{gcn_forward_padded.1} parent=1 // pred_check_branch
      %16 = sbr.rel (0) target = $region9
    $region8: #{gcn_forward_padded.1} parent=1 // pred_region
      _
    $region9: #{gcn_forward_padded.1} parent=1 // pred_fallthru
      _
    // Predicated region
    $region10: #{gcn_forward_padded.1} parent=1 // pred_check
      _
    $region11: #{gcn_forward_padded.1} parent=1 // pred_check_branch
      %18 = sbr.rel (0) target = $region13
    $region12: #{gcn_forward_padded.1} parent=1 // pred_region
      _
    $region13: #{gcn_forward_padded.1} parent=1 // pred_fallthru
      _
    // Predicated region
    $region14: #{gcn_forward_padded.1} parent=1 // pred_check
      _
    $region15: #{gcn_forward_padded.1} parent=1 // pred_check_branch
      %20 = sbr.rel (0) target = $region17
    $region16: #{gcn_forward_padded.1} parent=1 // pred_region
      _
    $region17: #{gcn_forward_padded.1} parent=1 // pred_fallthru
      _
    // Predicated region
    $region18: #{gcn_forward_padded.1} parent=1 // pred_check
      _
    $region19: #{gcn_forward_padded.1} parent=1 // pred_check_branch
      %22 = sbr.rel (0) target = $region21
    $region20: #{gcn_forward_padded.1} parent=1 // pred_region
      %24 = vsyncadd [#allocation3], 0
      %s25 = sshll.u32 %s4, 4
      %s26 = int_to_ptr.hbm [resolvable:$true] %s25
      %s27 = sshll.u32 [#allocation2], 4
      %s28 = int_to_ptr.vmem [resolvable:$true] %s27
      %33 = dma.hbm_to_vmem [thread:$0]  %s26, 1024, %s28, [#allocation3], 64, 64, 4
    $region21: #{gcn_forward_padded.1} parent=1 // pred_fallthru
      _
    // Predicated region
    $region22: #{gcn_forward_padded.1} parent=1 // pred_check
      _
    $region23: #{gcn_forward_padded.1} parent=1 // pred_check_branch
      %35 = sbr.rel (0) target = $region25
    $region24: #{gcn_forward_padded.1} parent=1 // pred_region
      _
    $region25: #{gcn_forward_padded.1} parent=1 // pred_fallthru
      _
    // Predicated region
    $region26: #{gcn_forward_padded.1} parent=1 // pred_check
      _
    $region27: #{gcn_forward_padded.1} parent=1 // pred_check_branch
      %37 = sbr.rel (0) target = $region29
    $region28: #{gcn_forward_padded.1} parent=1 // pred_region
      %39 = dma.done [#allocation3], 1024
    $region29: #{gcn_forward_padded.1} parent=1 // pred_fallthru
      _
    %v41 = vld [vmem:[%s0] sm:$0xff]
    %v42 = vld [vmem:[%s0 + $0x8] sm:$0xff]
    %v43 = vld [vmem:[%s0 + $0x10] sm:$0xff]
    %v44 = vld [vmem:[%s0 + $0x18] sm:$0xff]
    %v45 = vld [vmem:[%s0 + $0x20] sm:$0xff]
    %v46 = vld [vmem:[%s0 + $0x28] sm:$0xff]
    %v47 = vld [vmem:[%s0 + $0x30] sm:$0xff]
    %v48 = vld [vmem:[%s0 + $0x38] sm:$0xff]
    %v49 = vpack.c.bf16 %v42, %v41
    %v50 = vpack.c.bf16 %v44, %v43
    %v51 = vpack.c.bf16 %v46, %v45
    %v52 = vpack.c.bf16 %v48, %v47
    %v53 = vld [vmem:[%s1] sm:$0xff]
    %v54 = vld [vmem:[%s1 + $0x8] sm:$0xff]
    %v55 = vld [vmem:[%s1 + $0x10] sm:$0xff]
    %v56 = vld [vmem:[%s1 + $0x18] sm:$0xff]
    %v57 = vld [vmem:[%s1 + $0x20] sm:$0xff]
    %v58 = vld [vmem:[%s1 + $0x28] sm:$0xff]
    %v59 = vld [vmem:[%s1 + $0x30] sm:$0xff]
    %v60 = vld [vmem:[%s1 + $0x38] sm:$0xff]
    %v61 = vpack.c.bf16 %v54, %v53
    %v62 = vpack.c.bf16 %v56, %v55
    %v63 = vpack.c.bf16 %v58, %v57
    %v64 = vpack.c.bf16 %v60, %v59
    %v65 = vld [vmem:[%s2] sm:$0xf]
    %v66 = vld [vmem:[%s2 + $0x4] sm:$0xf]
    %v69 = vunpack.c.l.b16 %v65
    %v70 = vunpack.c.l.b16 %v66
    %v71 = vpack.c.b16 %v70, %v69
    %vm73 = vcmask 130048
    %v75 = vsel %vm73, %v61, 0
    %v78 = vsel %vm73, %v62, 0
    %v81 = vsel %vm73, %v63, 0
    %v84 = vsel %vm73, %v64, 0
    %86 = vmatpush.bf16.msra.mxu0 0
    %87 = vmatpush.bf16.msra.mxu0 0
    %88 = vmatpush.bf16.msra.mxu0 0
    %89 = vmatpush.bf16.msra.mxu0 0
    %90 = vmatpush.bf16.msra.mxu0 0
    %91 = vmatpush.bf16.msra.mxu0 0
    %92 = vmatpush.bf16.msra.mxu0 0
    %93 = vmatpush.bf16.msra.mxu0 %v71
    %94 = vmatmul.bf16.gmra.mxu0 %v75
    %v95 = vpop.f32.mrf.mxu0
    %v96 = vadd.f32 0.0, %v95
    %v97 = vpop.f32.mrf.mxu0
    %v98 = vadd.f32 0.0, %v97
    %99 = vmatmul.bf16.gmra.mxu0 %v78
    %v100 = vpop.f32.mrf.mxu0
    %v101 = vadd.f32 0.0, %v100
    %v102 = vpop.f32.mrf.mxu0
    %v103 = vadd.f32 0.0, %v102
    %104 = vmatmul.bf16.gmra.mxu0 %v81
    %v105 = vpop.f32.mrf.mxu0
    %v106 = vadd.f32 0.0, %v105
    %v107 = vpop.f32.mrf.mxu0
    %v108 = vadd.f32 0.0, %v107
    %109 = vmatmul.bf16.gmra.mxu0 %v84
    %v110 = vpop.f32.mrf.mxu0
    %v111 = vadd.f32 0.0, %v110
    %v112 = vpop.f32.mrf.mxu0
    %v113 = vadd.f32 0.0, %v112
    %114 = vdwg.mxu0
    %v115 = vpack.c.bf16 %v98, %v96
    %v116 = vpack.c.bf16 %v103, %v101
    %v117 = vpack.c.bf16 %v108, %v106
    %v118 = vpack.c.bf16 %v113, %v111
    %v119 = vld [vmem:[%s3] sm:$0x1]
    %v121 = vperm.slane %v119, 0
    %vm123 = vcmask 523264
    %v125 = vsel %vm123, %v49, 0
    %v128 = vsel %vm123, %v50, 0
    %v131 = vsel %vm123, %v51, 0
    %v134 = vsel %vm123, %v52, 0
    %136 = vmatpush.bf16.msra.mxu0 0
    %137 = vmatpush.bf16.msra.mxu0 0
    %138 = vmatpush.bf16.msra.mxu0 0
    %139 = vmatpush.bf16.msra.mxu0 0
    %140 = vmatpush.bf16.msra.mxu0 %v118
    %141 = vmatpush.bf16.msra.mxu0 %v117
    %142 = vmatpush.bf16.msra.mxu0 %v116
    %143 = vmatpush.bf16.msra.mxu0 %v115
    %144 = vmatmul.bf16.gmra.mxu0 %v125
    %v145 = vpop.f32.mrf.mxu0
    %v146 = vadd.f32 %v121, %v145
    %v147 = vpop.f32.mrf.mxu0
    %v148 = vadd.f32 %v121, %v147
    %149 = vmatmul.bf16.gmra.mxu0 %v128
    %v150 = vpop.f32.mrf.mxu0
    %v151 = vadd.f32 %v121, %v150
    %v152 = vpop.f32.mrf.mxu0
    %v153 = vadd.f32 %v121, %v152
    %154 = vmatmul.bf16.gmra.mxu0 %v131
    %v155 = vpop.f32.mrf.mxu0
    %v156 = vadd.f32 %v121, %v155
    %v157 = vpop.f32.mrf.mxu0
    %v158 = vadd.f32 %v121, %v157
    %159 = vmatmul.bf16.gmra.mxu0 %v134
    %v160 = vpop.f32.mrf.mxu0
    %v161 = vadd.f32 %v121, %v160
    %v162 = vpop.f32.mrf.mxu0
    %v163 = vadd.f32 %v121, %v162
    %164 = vdwg.mxu0
    %v165 = vmax.f32 %v146, 0.0
    %v166 = vmax.f32 %v148, 0.0
    %v167 = vmax.f32 %v151, 0.0
    %v168 = vmax.f32 %v153, 0.0
    %v169 = vmax.f32 %v156, 0.0
    %v170 = vmax.f32 %v158, 0.0
    %v171 = vmax.f32 %v161, 0.0
    %v172 = vmax.f32 %v163, 0.0
    %v173 = vpack.c.bf16 %v166, %v165
    %v174 = vpack.c.bf16 %v168, %v167
    %v175 = vpack.c.bf16 %v170, %v169
    %v176 = vpack.c.bf16 %v172, %v171
    %v177 = vld [vmem:[#allocation2] sm:$0xf]
    %v178 = vld [vmem:[#allocation2 + $0x4] sm:$0xf]
    %v179 = vld [vmem:[#allocation2 + $0x8] sm:$0xf]
    %v180 = vld [vmem:[#allocation2 + $0xc] sm:$0xf]
    %v181 = vld [vmem:[#allocation2 + $0x10] sm:$0xf]
    %v182 = vld [vmem:[#allocation2 + $0x14] sm:$0xf]
    %v183 = vld [vmem:[#allocation2 + $0x18] sm:$0xf]
    %v184 = vld [vmem:[#allocation2 + $0x1c] sm:$0xf]
    %v185 = vld [vmem:[#allocation2 + $0x20] sm:$0xf]
    %v186 = vld [vmem:[#allocation2 + $0x24] sm:$0xf]
    %v187 = vld [vmem:[#allocation2 + $0x28] sm:$0xf]
    %v188 = vld [vmem:[#allocation2 + $0x2c] sm:$0xf]
    %v189 = vld [vmem:[#allocation2 + $0x30] sm:$0xf]
    %v190 = vld [vmem:[#allocation2 + $0x34] sm:$0xf]
    %v191 = vld [vmem:[#allocation2 + $0x38] sm:$0xf]
    %v192 = vld [vmem:[#allocation2 + $0x3c] sm:$0xf]
    %v209 = vunpack.c.l.b16 %v177
    %v210 = vunpack.c.l.b16 %v178
    %v211 = vunpack.c.l.b16 %v179
    %v212 = vunpack.c.l.b16 %v180
    %v213 = vunpack.c.l.b16 %v181
    %v214 = vunpack.c.l.b16 %v182
    %v215 = vunpack.c.l.b16 %v183
    %v216 = vunpack.c.l.b16 %v184
    %v217 = vunpack.c.l.b16 %v185
    %v218 = vunpack.c.l.b16 %v186
    %v219 = vunpack.c.l.b16 %v187
    %v220 = vunpack.c.l.b16 %v188
    %v221 = vunpack.c.l.b16 %v189
    %v222 = vunpack.c.l.b16 %v190
    %v223 = vunpack.c.l.b16 %v191
    %v224 = vunpack.c.l.b16 %v192
    %v225 = vpack.c.b16 %v210, %v209
    %v226 = vpack.c.b16 %v212, %v211
    %v227 = vpack.c.b16 %v214, %v213
    %v228 = vpack.c.b16 %v216, %v215
    %v229 = vpack.c.b16 %v218, %v217
    %v230 = vpack.c.b16 %v220, %v219
    %v231 = vpack.c.b16 %v222, %v221
    %v232 = vpack.c.b16 %v224, %v223
    %241 = vmatpush.bf16.msra.mxu0 %v232
    %242 = vmatpush.bf16.msra.mxu0 %v231
    %243 = vmatpush.bf16.msra.mxu0 %v230
    %244 = vmatpush.bf16.msra.mxu0 %v229
    %245 = vmatpush.bf16.msra.mxu0 %v228
    %246 = vmatpush.bf16.msra.mxu0 %v227
    %247 = vmatpush.bf16.msra.mxu0 %v226
    %248 = vmatpush.bf16.msra.mxu0 %v225
    %249 = vmatmul.bf16.gmra.mxu0 %v173
    %v250 = vpop.f32.mrf.mxu0
    %v251 = vadd.f32 0.0, %v250
    %v252 = vpop.f32.mrf.mxu0
    %v253 = vadd.f32 0.0, %v252
    %254 = vmatmul.bf16.gmra.mxu0 %v174
    %v255 = vpop.f32.mrf.mxu0
    %v256 = vadd.f32 0.0, %v255
    %v257 = vpop.f32.mrf.mxu0
    %v258 = vadd.f32 0.0, %v257
    %259 = vmatmul.bf16.gmra.mxu0 %v175
    %v260 = vpop.f32.mrf.mxu0
    %v261 = vadd.f32 0.0, %v260
    %v262 = vpop.f32.mrf.mxu0
    %v263 = vadd.f32 0.0, %v262
    %264 = vmatmul.bf16.gmra.mxu0 %v176
    %v265 = vpop.f32.mrf.mxu0
    %v266 = vadd.f32 0.0, %v265
    %v267 = vpop.f32.mrf.mxu0
    %v268 = vadd.f32 0.0, %v267
    %269 = vdwg.mxu0
    %v270 = vpack.c.bf16 %v253, %v251
    %v271 = vpack.c.bf16 %v258, %v256
    %v272 = vpack.c.bf16 %v263, %v261
    %v273 = vpack.c.bf16 %v268, %v266
    %v274 = vld [vmem:[%s5] sm:$0x1]
    %v276 = vperm.slane %v274, 0
    %278 = vmatpush.bf16.msra.mxu0 0
    %279 = vmatpush.bf16.msra.mxu0 0
    %280 = vmatpush.bf16.msra.mxu0 0
    %281 = vmatpush.bf16.msra.mxu0 0
    %282 = vmatpush.bf16.msra.mxu0 %v273
    %283 = vmatpush.bf16.msra.mxu0 %v272
    %284 = vmatpush.bf16.msra.mxu0 %v271
    %285 = vmatpush.bf16.msra.mxu0 %v270
    %286 = vmatmul.bf16.gmra.mxu0 %v125
    %v287 = vpop.f32.mrf.mxu0
    %v288 = vadd.f32 %v276, %v287
    %v289 = vpop.f32.mrf.mxu0
    %v290 = vadd.f32 %v276, %v289
    %291 = vmatmul.bf16.gmra.mxu0 %v128
    %v292 = vpop.f32.mrf.mxu0
    %v293 = vadd.f32 %v276, %v292
    %v294 = vpop.f32.mrf.mxu0
    %v295 = vadd.f32 %v276, %v294
    %296 = vmatmul.bf16.gmra.mxu0 %v131
    %v297 = vpop.f32.mrf.mxu0
    %v298 = vadd.f32 %v276, %v297
    %v299 = vpop.f32.mrf.mxu0
    %v300 = vadd.f32 %v276, %v299
    %301 = vmatmul.bf16.gmra.mxu0 %v134
    %v302 = vpop.f32.mrf.mxu0
    %v303 = vadd.f32 %v276, %v302
    %v304 = vpop.f32.mrf.mxu0
    %v305 = vadd.f32 %v276, %v304
    %306 = vdwg.mxu0
    %v307 = vlaneseq
    %v308 = vand.u32 %v307, 127
    %vm309 = vcmp.lt.s32.totalorder %v308, 8
    %v310 = vsel %vm309, %v288, -1e+30
    %v311 = vsel %vm309, %v290, -1e+30
    %v312 = vsel %vm309, %v293, -1e+30
    %v313 = vsel %vm309, %v295, -1e+30
    %v314 = vsel %vm309, %v298, -1e+30
    %v315 = vsel %vm309, %v300, -1e+30
    %v316 = vsel %vm309, %v303, -1e+30
    %v317 = vsel %vm309, %v305, -1e+30
    %318 = vmax.xlane.f32.xlu0 %v310
    %v319 = vpop.xlane.xlu0 %318
    %320 = vmax.xlane.f32.xlu0 %v311
    %v321 = vpop.xlane.xlu0 %320
    %322 = vmax.xlane.f32.xlu0 %v312
    %v323 = vpop.xlane.xlu0 %322
    %324 = vmax.xlane.f32.xlu0 %v313
    %v325 = vpop.xlane.xlu0 %324
    %326 = vmax.xlane.f32.xlu0 %v314
    %v327 = vpop.xlane.xlu0 %326
    %328 = vmax.xlane.f32.xlu0 %v315
    %v329 = vpop.xlane.xlu0 %328
    %330 = vmax.xlane.f32.xlu0 %v316
    %v331 = vpop.xlane.xlu0 %330
    %332 = vmax.xlane.f32.xlu0 %v317
    %v333 = vpop.xlane.xlu0 %332
    %v334 = vsub.f32 %v310, %v319
    %v335 = vsub.f32 %v311, %v321
    %v336 = vsub.f32 %v312, %v323
    %v337 = vsub.f32 %v313, %v325
    %v338 = vsub.f32 %v314, %v327
    %v339 = vsub.f32 %v315, %v329
    %v340 = vsub.f32 %v316, %v331
    %v341 = vsub.f32 %v317, %v333
    %v342 = vmul.f32 %v334, 1.442695
    %v343 = vpow.pop %v342
    %v344 = vmul.f32 %v335, 1.442695
    %v345 = vpow.pop %v344
    %v346 = vmul.f32 %v336, 1.442695
    %v347 = vpow.pop %v346
    %v348 = vmul.f32 %v337, 1.442695
    %v349 = vpow.pop %v348
    %v350 = vmul.f32 %v338, 1.442695
    %v351 = vpow.pop %v350
    %v352 = vmul.f32 %v339, 1.442695
    %v353 = vpow.pop %v352
    %v354 = vmul.f32 %v340, 1.442695
    %v355 = vpow.pop %v354
    %v356 = vmul.f32 %v341, 1.442695
    %v357 = vpow.pop %v356
    %358 = vadd.xlane.f32.xlu0 %v343
    %v359 = vpop.xlane.xlu0 %358
    %360 = vadd.xlane.f32.xlu0 %v345
    %v361 = vpop.xlane.xlu0 %360
    %362 = vadd.xlane.f32.xlu0 %v347
    %v363 = vpop.xlane.xlu0 %362
    %364 = vadd.xlane.f32.xlu0 %v349
    %v365 = vpop.xlane.xlu0 %364
    %366 = vadd.xlane.f32.xlu0 %v351
    %v367 = vpop.xlane.xlu0 %366
    %368 = vadd.xlane.f32.xlu0 %v353
    %v369 = vpop.xlane.xlu0 %368
    %370 = vadd.xlane.f32.xlu0 %v355
    %v371 = vpop.xlane.xlu0 %370
    %372 = vadd.xlane.f32.xlu0 %v357
    %v373 = vpop.xlane.xlu0 %372
    %v374 = vlog2.pop %v359
    %v375 = vmul.f32 %v374, 0.6931472
    %v376 = vlog2.pop %v361
    %v377 = vmul.f32 %v376, 0.6931472
    %v378 = vlog2.pop %v363
    %v379 = vmul.f32 %v378, 0.6931472
    %v380 = vlog2.pop %v365
    %v381 = vmul.f32 %v380, 0.6931472
    %v382 = vlog2.pop %v367
    %v383 = vmul.f32 %v382, 0.6931472
    %v384 = vlog2.pop %v369
    %v385 = vmul.f32 %v384, 0.6931472
    %v386 = vlog2.pop %v371
    %v387 = vmul.f32 %v386, 0.6931472
    %v388 = vlog2.pop %v373
    %v389 = vmul.f32 %v388, 0.6931472
    %v390 = vsub.f32 %v334, %v375
    %v391 = vsub.f32 %v335, %v377
    %v392 = vsub.f32 %v336, %v379
    %v393 = vsub.f32 %v337, %v381
    %v394 = vsub.f32 %v338, %v383
    %v395 = vsub.f32 %v339, %v385
    %v396 = vsub.f32 %v340, %v387
    %v397 = vsub.f32 %v341, %v389
    %398 = vst [vmem:[#allocation5] sm:$0xff] %v390
    %399 = vst [vmem:[#allocation5 + $0x8] sm:$0xff] %v391
    %400 = vst [vmem:[#allocation5 + $0x10] sm:$0xff] %v392
    %401 = vst [vmem:[#allocation5 + $0x18] sm:$0xff] %v393
    %402 = vst [vmem:[#allocation5 + $0x20] sm:$0xff] %v394
    %403 = vst [vmem:[#allocation5 + $0x28] sm:$0xff] %v395
    %404 = vst [vmem:[#allocation5 + $0x30] sm:$0xff] %v396
    %405 = vst [vmem:[#allocation5 + $0x38] sm:$0xff] %v397
    // Predicated region
    $region30: #{gcn_forward_padded.1} parent=1 // pred_check
      _
    $region31: #{gcn_forward_padded.1} parent=1 // pred_check_branch
      %407 = sbr.rel (0) target = $region33
    $region32: #{gcn_forward_padded.1} parent=1 // pred_region
      %409 = vsyncadd [#allocation4], 0
      %s410 = sshll.u32 [#allocation5], 4
      %s411 = int_to_ptr.vmem [resolvable:$true] %s410
      %s412 = sshll.u32 %s6, 4
      %s413 = int_to_ptr.hbm [resolvable:$true] %s412
      %418 = dma.vmem_to_hbm [thread:$0]  %s411, 1024, %s413, [#allocation4], 128, 128, 8
    $region33: #{gcn_forward_padded.1} parent=1 // pred_fallthru
      _
    // Predicated region
    $region34: #{gcn_forward_padded.1} parent=1 // pred_check
      _
    $region35: #{gcn_forward_padded.1} parent=1 // pred_check_branch
      %420 = sbr.rel (0) target = $region37
    $region36: #{gcn_forward_padded.1} parent=1 // pred_region
      %422 = dma.done [#allocation4], 1024
    $region37: #{gcn_forward_padded.1} parent=1 // pred_fallthru
      _
    %423 = vsyncpa [#allocation3], 1
    %424 = vsyncpa [#allocation4], 1

</llo_original>
